<compile_context>
chip_gen: v6e
topology: v6e:2x2x1
jax: 0.10.0
libtpu: 0.0.40
codegen_flags: <defaults>
</compile_context>

<pallas_src>
import functools

import jax
import jax.numpy as jnp
from jax.experimental import pallas as pl
from jax.experimental.pallas import tpu as pltpu


def _fused_kernel(patch_ref, w_ref, params_ref, o_ref, *, last_relu):
    # conv-as-matmul on im2col patches (MXU), f32 accumulation.
    y = jnp.dot(patch_ref[...], w_ref[...], preferred_element_type=jnp.float32)
    # folded per-channel (alpha * BN scale) and (bias/BN shift): rows 0 / 1.
    scale = params_ref[0:1, :]
    shift = params_ref[1:2, :]
    y = y * scale + shift
    if last_relu:
        y = jnp.maximum(y, 0.0)
    o_ref[...] = y.astype(o_ref.dtype)


def _quantize_weight_W2(w):
    """weight_tnn_bin with W==2: mean-center over in-channels, clamp, sign * alpha."""
    w = w - jnp.mean(w, axis=1, keepdims=True)
    w = jnp.clip(w, -1.0, 1.0)
    alpha = jnp.mean(jnp.abs(w), axis=(1, 2, 3), keepdims=True)   # per out-channel
    return jnp.sign(w) * alpha


def _im2col_nchw(x, kh, kw, stride, padding):
    N, C, H, W = x.shape
    Ho = (H + 2 * padding - kh) // stride + 1
    Wo = (W + 2 * padding - kw) // stride + 1
    xp = jnp.pad(x, ((0, 0), (0, 0), (padding, padding), (padding, padding)))
    cols = []
    for i in range(kh):
        for j in range(kw):
            cols.append(xp[:, :, i:i + stride * Ho:stride, j:j + stride * Wo:stride])
    p = jnp.stack(cols, axis=0)           # (KH*KW, N, C, Ho, Wo)
    p = p.transpose(1, 3, 4, 2, 0)        # (N, Ho, Wo, C, KH*KW)  -> K is c_in-major
    return p.reshape(N * Ho * Wo, C * kh * kw), Ho, Wo


def _round_up(x, m):
    return ((x + m - 1) // m) * m


def _pick_tm(M):
    """Largest M tile in {1024,512,256,128} that still yields >=2 grid steps
    (so the parallel M axis can shard across v7x's 2 TensorCores)."""
    for tm in (1024, 512, 256):
        if M >= 2 * tm:
            return tm
    return 128


class TnnBinConv2d:
    """JAX/Pallas port of Tnn_Bin_Conv2d (deterministic synthetic parameters)."""

    def __init__(self, key, input_channels, output_channels, kernel_size, stride,
                 padding, dropout=0, groups=1, last_relu=0, A=2, W=2, eps=1e-5):
        assert groups == 1  # TODO(synk): grouped conv not implemented
        if W == 3:
            raise NotImplementedError  # TODO(synk): W==3 ternary-weight path not implemented
        self.A, self.W = A, W
        self.kernel_size, self.stride, self.padding = kernel_size, stride, padding
        self.dropout_ratio = dropout
        self.last_relu = last_relu
        self.eps = eps
        self.out_channels = output_channels

        k_w, k_b, k_g, k_bt, k_m, k_v = jax.random.split(key, 6)
        fan_in = input_channels * kernel_size * kernel_size
        bound = 1.0 / (fan_in ** 0.5)
        self.weight = jax.random.uniform(
            k_w, (output_channels, input_channels, kernel_size, kernel_size),
            jnp.float32, -bound, bound)
        self.bias = jax.random.uniform(k_b, (output_channels,), jnp.float32, -bound, bound)
        # BatchNorm2d_bin(affine_flag=2): learnable gamma & beta + running stats.
        self.gamma = jax.random.uniform(k_g, (output_channels,), jnp.float32, 0.5, 1.5)
        self.beta = 0.1 * jax.random.normal(k_bt, (output_channels,), jnp.float32)
        self.running_mean = 0.1 * jax.random.normal(k_m, (output_channels,), jnp.float32)
        self.running_var = jax.random.uniform(k_v, (output_channels,), jnp.float32, 0.5, 1.5)

        # Cache the quantized/folded inference constants once (not per forward).
        self._prepare_inference_constants()

    # -- host-side folding (done once) ---------------------------------------
    def _prepare_inference_constants(self):
        Cout, Cin, kh, kw = self.weight.shape
        K = Cin * kh * kw
        Cp = _round_up(Cout, 128)                       # lane-dense output / MXU width
        self._use_narrow = (self.A == 2 and self.W == 2)  # both operands exactly ternary

        if self.W == 2:
            wc = self.weight - jnp.mean(self.weight, axis=1, keepdims=True)
            wc = jnp.clip(wc, -1.0, 1.0)
            alpha = jnp.mean(jnp.abs(wc), axis=(1, 2, 3))   # (Cout,) per-out-channel scale
            w_core = jnp.sign(wc)                           # ternary {-1,0,+1}
        else:
            alpha = jnp.ones((Cout,), jnp.float32)
            w_core = self.weight                            # full precision path

        w_mat = w_core.reshape(Cout, K).T                   # (K, Cout), c_in-major K
        w_mat = jnp.pad(w_mat, ((0, 0), (0, Cp - Cout)))    # pad Cout -> Cp with zeros
        mat_dtype = jnp.bfloat16 if self._use_narrow else jnp.float32
        self._w_mat = w_mat.astype(mat_dtype)

        # Fold alpha + bias + BatchNorm into one per-channel (scale, shift).
        inv_std = jax.lax.rsqrt(self.running_var + self.eps)
        scale = alpha * self.gamma * inv_std
        shift = (self.bias - self.running_mean) * self.gamma * inv_std + self.beta
        params = jnp.zeros((8, Cp), jnp.float32)            # single (8, Cp) tile
        params = params.at[0, :Cout].set(scale)
        params = params.at[1, :Cout].set(shift)
        self._params = params
        self._K, self._Cp = K, Cp

    def quantized_weight(self):
        if self.W == 2:
            return _quantize_weight_W2(self.weight)
        return self.weight  # W not in (2, 3): full precision

    # -- forward -------------------------------------------------------------
    def __call__(self, x):
        # TODO(synk): training-mode dropout not implemented (dropout_ratio defaults to 0 -> no-op)
        N, Cin, H, Wsp = x.shape
        kh = kw = self.kernel_size
        Cout, K, Cp = self.out_channels, self._K, self._Cp

        # Activation quantization BEFORE im2col (1/9th the work, narrow patch matrix).
        if self.A == 2:
            xa = jnp.sign(x)              # torch.sign semantics: sign(0) == 0
        else:
            xa = jnp.maximum(x, 0.0)      # A != 2 -> F.relu
        patch_dtype = jnp.bfloat16 if self._use_narrow else jnp.float32
        xa = xa.astype(patch_dtype)

        # TODO(synk): im2col is still materialized in HBM (KHxKW-duplicated); a fully
        # fused slab+halo kernel would avoid the 9x read amplification.
        patches, Ho, Wo = _im2col_nchw(xa, kh, kw, self.stride, self.padding)
        M = patches.shape[0]

        tm = _pick_tm(M)
        Mp = pl.cdiv(M, tm) * tm
        if Mp != M:
            patches = jnp.pad(patches, ((0, Mp - M), (0, 0)))

        itemsize = jnp.dtype(patch_dtype).itemsize
        vmem_need = (2 * tm * K * itemsize      # double-buffered patch tiles
                     + 2 * K * Cp * itemsize    # weight block
                     + 2 * 8 * Cp * 4           # params block
                     + 2 * tm * Cp * 4)         # double-buffered output tiles
        vmem_limit = int(min(64 << 20, max(32 << 20, 2 * vmem_need)))  # v7x-safe cap

        cost = pl.CostEstimate(
            flops=2 * Mp * K * Cp,
            transcendentals=0,
            bytes_accessed=Mp * K * itemsize + K * Cp * itemsize
                           + 8 * Cp * 4 + Mp * Cp * 4)

        kernel = functools.partial(_fused_kernel, last_relu=bool(self.last_relu))
        out = pl.pallas_call(
            kernel,
            out_shape=jax.ShapeDtypeStruct((Mp, Cp), jnp.float32),
            grid=(Mp // tm,),
            in_specs=[
                pl.BlockSpec((tm, K), lambda i: (i, 0)),
                pl.BlockSpec((K, Cp), lambda i: (0, 0)),
                pl.BlockSpec((8, Cp), lambda i: (0, 0)),
            ],
            out_specs=pl.BlockSpec((tm, Cp), lambda i: (i, 0)),
            compiler_params=pltpu.CompilerParams(
                dimension_semantics=("parallel",),
                vmem_limit_bytes=vmem_limit),
            cost_estimate=cost,
        )(patches, self._w_mat, self._params)

        # NOTE: for a full network, keep NHWC between layers and transpose only at the
        # network boundary; the NCHW transpose here matches the PyTorch module API.
        out = out[:M, :Cout].reshape(N, Ho, Wo, Cout).transpose(0, 3, 1, 2)
        return out


def _reference(mod, x):
    """Pure-JAX reference of the same forward pass (for correctness check)."""
    xa = jnp.sign(x) if mod.A == 2 else jax.nn.relu(x)
    wq = mod.quantized_weight()
    y = jax.lax.conv_general_dilated(
        xa, wq, (mod.stride, mod.stride),
        ((mod.padding, mod.padding), (mod.padding, mod.padding)),
        dimension_numbers=("NCHW", "OIHW", "NCHW"))
    y = y + mod.bias[None, :, None, None]
    inv_std = jax.lax.rsqrt(mod.running_var + mod.eps)[None, :, None, None]
    y = (y - mod.running_mean[None, :, None, None]) * inv_std \
        * mod.gamma[None, :, None, None] + mod.beta[None, :, None, None]
    if mod.last_relu:
        y = jnp.maximum(y, 0.0)
    return y


if __name__ == "__main__":
    key = jax.random.PRNGKey(0)
    k_param, k_x = jax.random.split(key)

    N, Cin, Hsp, Wsp = 2, 4, 16, 16
    Cout = 8
    x = jax.random.normal(k_x, (N, Cin, Hsp, Wsp), jnp.float32)

    mod = TnnBinConv2d(k_param, input_channels=Cin, output_channels=Cout,
                       kernel_size=3, stride=1, padding=1,
                       dropout=0, groups=1, last_relu=1, A=2, W=2)

    out = mod(x)
    out = jax.block_until_ready(out)

    ref = jax.block_until_ready(_reference(mod, x))
    assert out.shape == (N, Cout, Hsp, Wsp), out.shape
    assert jnp.allclose(out, ref, atol=1e-4, rtol=1e-4), \
        float(jnp.max(jnp.abs(out - ref)))

    print("KERNEL_OK")
</pallas_src>

<mosaic_0001>
module attributes {stable_mosaic.version = 11 : i64} {
  func.func @_fused_kernel(%arg0: i32, %arg1: memref<256x36xbf16, #tpu.memory_space<vmem>>, %arg2: memref<36x128xbf16, #tpu.memory_space<vmem>>, %arg3: memref<8x128xf32, #tpu.memory_space<vmem>>, %arg4: memref<256x128xf32, #tpu.memory_space<vmem>>) attributes {dimension_semantics = [#tpu.dimension_semantics<parallel>], iteration_bounds = array<i64: 2>, scalar_prefetch = 0 : i64, scratch_operands = 0 : i64, tpu.core_type = #tpu.core_type<tc>, window_params = [{transform_indices = @transform_0, window_bounds = array<i64: 256, 36>}, {pipeline_mode = #tpu.pipeline_mode<synchronous>, transform_indices = @transform_1, window_bounds = array<i64: 36, 128>}, {pipeline_mode = #tpu.pipeline_mode<synchronous>, transform_indices = @transform_2, window_bounds = array<i64: 8, 128>}, {transform_indices = @transform_3, window_bounds = array<i64: 256, 128>}]} {
    %c0 = arith.constant 0 : index
    %c0_0 = arith.constant 0 : index
    %0 = vector.load %arg1[%c0, %c0_0] : memref<256x36xbf16, #tpu.memory_space<vmem>>, vector<256x36xbf16>
    %c0_1 = arith.constant 0 : index
    %c0_2 = arith.constant 0 : index
    %1 = vector.load %arg2[%c0_1, %c0_2] : memref<36x128xbf16, #tpu.memory_space<vmem>>, vector<36x128xbf16>
    %cst = arith.constant dense<0.000000e+00> : vector<256x128xf32>
    %2 = tpu.matmul %0, %1, %cst {dimension_numbers = #tpu.dot_dimension_numbers<[1], [0], [0], [1], [0, 0, 1, 1], [], []>} : vector<256x36xbf16>, vector<36x128xbf16>, vector<256x128xf32> -> vector<256x128xf32>
    %c0_3 = arith.constant 0 : index
    %c0_4 = arith.constant 0 : index
    %3 = vector.load %arg3[%c0_3, %c0_4] : memref<8x128xf32, #tpu.memory_space<vmem>>, vector<1x128xf32>
    %c1 = arith.constant 1 : index
    %c0_5 = arith.constant 0 : index
    %4 = vector.load %arg3[%c1, %c0_5] : memref<8x128xf32, #tpu.memory_space<vmem>>, vector<1x128xf32>
    %5 = vector.broadcast %3 : vector<1x128xf32> to vector<256x128xf32>
    %6 = arith.mulf %2, %5 : vector<256x128xf32>
    %7 = vector.broadcast %4 : vector<1x128xf32> to vector<256x128xf32>
    %8 = arith.addf %6, %7 : vector<256x128xf32>
    %cst_6 = arith.constant 0.000000e+00 : f32
    %9 = vector.broadcast %cst_6 : f32 to vector<256x128xf32>
    %10 = arith.maximumf %8, %9 : vector<256x128xf32>
    %c0_7 = arith.constant 0 : index
    %c0_8 = arith.constant 0 : index
    %11 = vector.load %arg4[%c0_7, %c0_8] : memref<256x128xf32, #tpu.memory_space<vmem>>, vector<256x128xf32>
    tpu.vector_store %arg4[%c0_7, %c0_8], %10 {strides = array<i32>} : memref<256x128xf32, #tpu.memory_space<vmem>>, vector<256x128xf32>,
    return
  }
  func.func @transform_0(%arg0: i32) -> (i32, i32) {
    %c0_i32 = arith.constant 0 : i32
    %c0_i32_0 = arith.constant 0 : i32
    return %arg0, %c0_i32 : i32, i32
  }
  func.func @transform_1(%arg0: i32) -> (i32, i32) {
    %c0_i32 = arith.constant 0 : i32
    %c0_i32_0 = arith.constant 0 : i32
    %c0_i32_1 = arith.constant 0 : i32
    return %c0_i32, %c0_i32_0 : i32, i32
  }
  func.func @transform_2(%arg0: i32) -> (i32, i32) {
    %c0_i32 = arith.constant 0 : i32
    %c0_i32_0 = arith.constant 0 : i32
    %c0_i32_1 = arith.constant 0 : i32
    return %c0_i32, %c0_i32_0 : i32, i32
  }
  func.func @transform_3(%arg0: i32) -> (i32, i32) {
    %c0_i32 = arith.constant 0 : i32
    %c0_i32_0 = arith.constant 0 : i32
    return %arg0, %c0_i32 : i32, i32
  }
}

</mosaic_0001>

<llo_original>
// kernel: tpu_custom_call.1
$region0: #{tpu_custom_call.1}
  #allocation0 [shape = 'u32[]', space=smem, size = 0x4, offset = 0x4, fixed_abs, tag = 'smem constant byte address 0x4 - core index']
  #allocation1 [shape = 'u32[144,128]{1,0:T(1,128)}', space=vmem, size = 0x12000, scoped, tag = 'internal scratch']
  %s0 = inlined_call_operand.vmem [shape: bf16[512,36], index: 0, kind: input, shape index: {}]
  %s1 = inlined_call_operand.vmem [shape: bf16[36,128], index: 1, kind: input, shape index: {}]
  %s2 = inlined_call_operand.vmem [shape: f32[8,128], index: 2, kind: input, shape index: {}]
  %s3 = inlined_call_operand.hbm [shape: f32[512,128], index: 3, kind: output, shape index: {}]
  %s4 = sld [smem:[#allocation0]]
  $region45: #{tpu_custom_call.1} parent=0
    _
  %s6 = ssub.s32 1, %s4
  %s7 = scalar_select 0, %s6, %s4
  $region1: #{tpu_custom_call.1} parent=0
    #allocation2 [shape = 'u8[262144]{0}', space=vmem, size = 0x40000, scoped, tag = 'output window, operand 0']
    #allocation3 [shape = 's32[2]{0}', space=sflag, size = 0x8, scoped, tag = 'scoped memory for tpu_custom_call.1']
    %8 = vsyncpa [#allocation3], 0
    %s9 = scalar_lea.sflag [#allocation3], 1
    %10 = vsyncpa %s9, 0
    loop: start=0, step=1, limit=4
    $region2: #{tpu_custom_call.1} parent=1 // loop_pre_header
      _
    $region3: #{tpu_custom_call.1} parent=1 // loop_header
      %s12 = sphi 0, %s16
      %p13 = scmp.ge.s32.totalorder %s12, 4
      %s22 = sphi 0, %s24
      %s25 = sphi 0, %s22
      %s26 = sphi 0, %s25
      %s42 = sphi 0, %s26
      %s46 = sphi 0, %s46
      %s48 = sphi 0, %s46
      %s49 = sphi 0, %s48
      %s63 = sphi 0, %s49
      %s67 = sphi 0, %s67
      %s69 = sphi 0, %s67
      %s70 = sphi 0, %s69
      %s84 = sphi 0, %s70
      %s90 = sphi 0, %s92
      %s93 = sphi 0, %s90
      %s94 = sphi 0, %s93
      %s110 = sphi 0, %s94
    $region4: #{tpu_custom_call.1} parent=1 // loop_header_branch
      %15 = sbr.rel (%p13) target = $region8
    $region5: #{tpu_custom_call.1} parent=1 // loop_body
      %s17 = ssub.s32 %s12, 1
      %s18 = ssub.s32 %s12, 2
      %s19 = sadd.s32 %s12, 1
      %s20 = ssub.s32 %s12, %s19
      %p21 = scmp.eq.s32.totalorder %s20, 0
      %s23 = sadd.s32 %s22, 1
      %s24 = scalar_select %p21, %s22, %s23
      %p27 = pneg %p21
      %p28 = scmp.eq.s32.totalorder %s12, 1
      %p29 = por %p27, %p28
      %p30 = scmp.ne.s32.totalorder %s22, %s25
      %p31 = scmp.eq.s32.totalorder %s12, 0
      %p32 = por %p30, %p31
      %p33 = scmp.ne.s32.totalorder %s22, %s25
      %p34 = scmp.eq.s32.totalorder %s17, 1
      %p35 = por %p33, %p34
      %p36 = scmp.ne.s32.totalorder %s25, %s26
      %p37 = scmp.eq.s32.totalorder %s17, 0
      %p38 = por %p36, %p37
      %p39 = scmp.ne.s32.totalorder %s25, %s26
      %p40 = scmp.eq.s32.totalorder %s18, 1
      %p41 = por %p39, %p40
      %p43 = scmp.ne.s32.totalorder %s26, %s42
      %p44 = scmp.eq.s32.totalorder %s18, 0
      %p45 = por %p43, %p44
      %s47 = sadd.s32 %s46, 1
      %p50 = scmp.eq.s32.totalorder %s12, 1
      %p51 = scmp.ne.s32.totalorder %s46, %s48
      %p52 = scmp.eq.s32.totalorder %s12, 0
      %p53 = por %p51, %p52
      %p54 = scmp.ne.s32.totalorder %s46, %s48
      %p55 = scmp.eq.s32.totalorder %s17, 1
      %p56 = por %p54, %p55
      %p57 = scmp.ne.s32.totalorder %s48, %s49
      %p58 = scmp.eq.s32.totalorder %s17, 0
      %p59 = por %p57, %p58
      %p60 = scmp.ne.s32.totalorder %s48, %s49
      %p61 = scmp.eq.s32.totalorder %s18, 1
      %p62 = por %p60, %p61
      %p64 = scmp.ne.s32.totalorder %s49, %s63
      %p65 = scmp.eq.s32.totalorder %s18, 0
      %p66 = por %p64, %p65
      %s68 = sadd.s32 %s67, 1
      %p71 = scmp.eq.s32.totalorder %s12, 1
      %p72 = scmp.ne.s32.totalorder %s67, %s69
      %p73 = scmp.eq.s32.totalorder %s12, 0
      %p74 = por %p72, %p73
      %p75 = scmp.ne.s32.totalorder %s67, %s69
      %p76 = scmp.eq.s32.totalorder %s17, 1
      %p77 = por %p75, %p76
      %p78 = scmp.ne.s32.totalorder %s69, %s70
      %p79 = scmp.eq.s32.totalorder %s17, 0
      %p80 = por %p78, %p79
      %p81 = scmp.ne.s32.totalorder %s69, %s70
      %p82 = scmp.eq.s32.totalorder %s18, 1
      %p83 = por %p81, %p82
      %p85 = scmp.ne.s32.totalorder %s70, %s84
      %p86 = scmp.eq.s32.totalorder %s18, 0
      %p87 = por %p85, %p86
      %s88 = ssub.s32 %s12, %s19
      %p89 = scmp.eq.s32.totalorder %s88, 0
      %s91 = sadd.s32 %s90, 1
      %s92 = scalar_select %p89, %s90, %s91
      %p95 = pneg %p89
      %p96 = scmp.eq.s32.totalorder %s12, 1
      %p97 = por %p95, %p96
      %p98 = scmp.ne.s32.totalorder %s90, %s93
      %p99 = scmp.eq.s32.totalorder %s12, 0
      %p100 = por %p98, %p99
      %p101 = scmp.ne.s32.totalorder %s90, %s93
      %p102 = scmp.eq.s32.totalorder %s17, 1
      %p103 = por %p101, %p102
      %p104 = scmp.ne.s32.totalorder %s93, %s94
      %p105 = scmp.eq.s32.totalorder %s17, 0
      %p106 = por %p104, %p105
      %p107 = scmp.ne.s32.totalorder %s93, %s94
      %p108 = scmp.eq.s32.totalorder %s18, 1
      %p109 = por %p107, %p108
      %p111 = scmp.ne.s32.totalorder %s94, %s110
      %p112 = scmp.eq.s32.totalorder %s18, 0
      %p113 = por %p111, %p112
      %p114 = scmp.le.s32.totalorder 1, %s12
      %p115 = scmp.lt.s32.totalorder %s12, 3
      %p116 = pnand %p114, %p115
      %p117 = pneg %p116
      // Predicated region
      $region9: #{tpu_custom_call.1} parent=5 // pred_check
        _
      $region10: #{tpu_custom_call.1} parent=5 // pred_check_branch
        %119 = sbr.rel (%p116) target = $region12
      $region11: #{tpu_custom_call.1} parent=5 // pred_region
        %s120 = ssub.s32 %s12, 1
        // Predicated region
        $region13: #{tpu_custom_call.1} parent=11 // pred_check
          %p121 = pneg %p59
        $region14: #{tpu_custom_call.1} parent=11 // pred_check_branch
          %123 = sbr.rel (%p121) target = $region16
        $region15: #{tpu_custom_call.1} parent=11 // pred_region
          _
        $region16: #{tpu_custom_call.1} parent=11 // pred_fallthru
          _
        // Predicated region
        $region17: #{tpu_custom_call.1} parent=11 // pred_check
          %p124 = pneg %p80
        $region18: #{tpu_custom_call.1} parent=11 // pred_check_branch
          %126 = sbr.rel (%p124) target = $region20
        $region19: #{tpu_custom_call.1} parent=11 // pred_region
          _
        $region20: #{tpu_custom_call.1} parent=11 // pred_fallthru
          _
      $region12: #{tpu_custom_call.1} parent=5 // pred_fallthru
        _
      %p127 = scmp.lt.s32.totalorder %s12, 2
      // Predicated region
      $region21: #{tpu_custom_call.1} parent=5 // pred_check
        %p128 = pneg %p127
      $region22: #{tpu_custom_call.1} parent=5 // pred_check_branch
        %130 = sbr.rel (%p128) target = $region24
      $region23: #{tpu_custom_call.1} parent=5 // pred_region
        // Predicated region
        $region25: #{tpu_custom_call.1} parent=23 // pred_check
          %p131 = pneg %p32
        $region26: #{tpu_custom_call.1} parent=23 // pred_check_branch
          %133 = sbr.rel (%p131) target = $region28
        $region27: #{tpu_custom_call.1} parent=23 // pred_region
          %s134 = smul.u32 32, %s12
          %p135 = scmp.lt.s32.totalorder %s134, 63
          %s136 = scalar_select %p135, %s134, 63
          %s137 = smul.addr %s136, 4
          %s138 = scalar_lea.vmem %s0, %s137
          %s139 = smul.u32 32, %s12
        $region28: #{tpu_custom_call.1} parent=23 // pred_fallthru
          _
      $region24: #{tpu_custom_call.1} parent=5 // pred_fallthru
        _
      %p140 = scmp.le.s32.totalorder 1, %s12
      %p141 = scmp.lt.s32.totalorder %s12, 3
      %p142 = pnand %p140, %p141
      %p143 = pneg %p142
      // Predicated region
      $region29: #{tpu_custom_call.1} parent=5 // pred_check
        _
      $region30: #{tpu_custom_call.1} parent=5 // pred_check_branch
        %145 = sbr.rel (%p142) target = $region32
      $region31: #{tpu_custom_call.1} parent=5 // pred_region
        %s146 = ssub.s32 %s12, 1
        %s147 = smul.u32 32, %s17
        %p148 = scmp.lt.s32.totalorder %s147, 63
        %s149 = scalar_select %p148, %s147, 63
        %s150 = smul.addr %s149, 4
        %s151 = scalar_lea.vmem %s0, %s150
        %p152 = pneg %p38
        %p153 = pneg %p35
        %p154 = pneg %p59
        %p155 = pneg %p56
        %p156 = pneg %p80
        %p157 = pneg %p77
        %p158 = pneg %p106
        %p159 = pneg %p103
        %s160 = sand.u32 %s93, 1
        %s161 = scalar_lea.sflag [#allocation3], %s160
        %s162 = sand.u32 %s93, 1
        %s163 = smul.addr %s162, 256
        %s164 = scalar_lea.vmem [#allocation2], %s163
        %s165 = smul.u32 32, %s17
        %p166 = scmp.lt.s32.totalorder %s165, 63
        %s167 = scalar_select %p166, %s165, 63
        %s168 = smul.addr %s167, 4
        %s169 = scalar_lea.vmem %s0, %s168
        %s170 = smul.u32 32, %s17
        %s171 = smul.u32 32, %s17
        %v173 = vld [vmem:[%s169] sm:$0xf]
        %v174 = vld [vmem:[%s169 + $0x4] sm:$0xf]
        %v175 = vld [vmem:[%s169 + $0x8] sm:$0xf]
        %v176 = vld [vmem:[%s169 + $0xc] sm:$0xf]
        %v177 = vld [vmem:[%s169 + $0x10] sm:$0xf]
        %v178 = vld [vmem:[%s169 + $0x14] sm:$0xf]
        %v179 = vld [vmem:[%s169 + $0x18] sm:$0xf]
        %v180 = vld [vmem:[%s169 + $0x1c] sm:$0xf]
        %v181 = vld [vmem:[%s169 + $0x20] sm:$0xf]
        %v182 = vld [vmem:[%s169 + $0x24] sm:$0xf]
        %v183 = vld [vmem:[%s169 + $0x28] sm:$0xf]
        %v184 = vld [vmem:[%s169 + $0x2c] sm:$0xf]
        %v185 = vld [vmem:[%s169 + $0x30] sm:$0xf]
        %v186 = vld [vmem:[%s169 + $0x34] sm:$0xf]
        %v187 = vld [vmem:[%s169 + $0x38] sm:$0xf]
        %v188 = vld [vmem:[%s169 + $0x3c] sm:$0xf]
        %v189 = vld [vmem:[%s169 + $0x40] sm:$0xf]
        %v190 = vld [vmem:[%s169 + $0x44] sm:$0xf]
        %v191 = vld [vmem:[%s169 + $0x48] sm:$0xf]
        %v192 = vld [vmem:[%s169 + $0x4c] sm:$0xf]
        %v193 = vld [vmem:[%s169 + $0x50] sm:$0xf]
        %v194 = vld [vmem:[%s169 + $0x54] sm:$0xf]
        %v195 = vld [vmem:[%s169 + $0x58] sm:$0xf]
        %v196 = vld [vmem:[%s169 + $0x5c] sm:$0xf]
        %v197 = vld [vmem:[%s169 + $0x60] sm:$0xf]
        %v198 = vld [vmem:[%s169 + $0x64] sm:$0xf]
        %v199 = vld [vmem:[%s169 + $0x68] sm:$0xf]
        %v200 = vld [vmem:[%s169 + $0x6c] sm:$0xf]
        %v201 = vld [vmem:[%s169 + $0x70] sm:$0xf]
        %v202 = vld [vmem:[%s169 + $0x74] sm:$0xf]
        %v203 = vld [vmem:[%s169 + $0x78] sm:$0xf]
        %v204 = vld [vmem:[%s169 + $0x7c] sm:$0xf]
        %v205 = vld [vmem:[%s1] sm:$0xf]
        %v206 = vld [vmem:[%s1 + $0x4] sm:$0xf]
        %v207 = vld [vmem:[%s1 + $0x8] sm:$0xf]
        %v208 = vld [vmem:[%s1 + $0xc] sm:$0xf]
        %v209 = vld [vmem:[%s1 + $0x10] sm:$0x3]
        %v242 = vunpack.c.l.b16 %v173
        %v243 = vunpack.c.l.b16 %v174
        %v244 = vunpack.c.l.b16 %v175
        %v245 = vunpack.c.l.b16 %v176
        %v246 = vunpack.c.l.b16 %v177
        %v247 = vunpack.c.l.b16 %v178
        %v248 = vunpack.c.l.b16 %v179
        %v249 = vunpack.c.l.b16 %v180
        %v250 = vunpack.c.l.b16 %v181
        %v251 = vunpack.c.l.b16 %v182
        %v252 = vunpack.c.l.b16 %v183
        %v253 = vunpack.c.l.b16 %v184
        %v254 = vunpack.c.l.b16 %v185
        %v255 = vunpack.c.l.b16 %v186
        %v256 = vunpack.c.l.b16 %v187
        %v257 = vunpack.c.l.b16 %v188
        %v258 = vunpack.c.l.b16 %v189
        %v259 = vunpack.c.l.b16 %v190
        %v260 = vunpack.c.l.b16 %v191
        %v261 = vunpack.c.l.b16 %v192
        %v262 = vunpack.c.l.b16 %v193
        %v263 = vunpack.c.l.b16 %v194
        %v264 = vunpack.c.l.b16 %v195
        %v265 = vunpack.c.l.b16 %v196
        %v266 = vunpack.c.l.b16 %v197
        %v267 = vunpack.c.l.b16 %v198
        %v268 = vunpack.c.l.b16 %v199
        %v269 = vunpack.c.l.b16 %v200
        %v270 = vunpack.c.l.b16 %v201
        %v271 = vunpack.c.l.b16 %v202
        %v272 = vunpack.c.l.b16 %v203
        %v273 = vunpack.c.l.b16 %v204
        %v274 = vpack.c.b16 %v243, %v242
        %v275 = vpack.c.b16 %v245, %v244
        %v276 = vpack.c.b16 %v247, %v246
        %v277 = vpack.c.b16 %v249, %v248
        %v278 = vpack.c.b16 %v251, %v250
        %v279 = vpack.c.b16 %v253, %v252
        %v280 = vpack.c.b16 %v255, %v254
        %v281 = vpack.c.b16 %v257, %v256
        %v282 = vpack.c.b16 %v259, %v258
        %v283 = vpack.c.b16 %v261, %v260
        %v284 = vpack.c.b16 %v263, %v262
        %v285 = vpack.c.b16 %v265, %v264
        %v286 = vpack.c.b16 %v267, %v266
        %v287 = vpack.c.b16 %v269, %v268
        %v288 = vpack.c.b16 %v271, %v270
        %v289 = vpack.c.b16 %v273, %v272
        %v295 = vunpack.c.l.b16 %v205
        %v296 = vunpack.c.l.b16 %v206
        %v297 = vunpack.c.l.b16 %v207
        %v298 = vunpack.c.l.b16 %v208
        %v299 = vunpack.c.l.b16 %v209
        %v300 = vpack.c.b16 %v296, %v295
        %v301 = vpack.c.b16 %v298, %v297
        %v302 = vpack.c.b16 %v299, %v299
        %vm305 = vcmask 293888
        %v307 = vsel %vm305, %v274, 0
        %v310 = vsel %vm305, %v275, 0
        %v313 = vsel %vm305, %v276, 0
        %v316 = vsel %vm305, %v277, 0
        %v319 = vsel %vm305, %v278, 0
        %v322 = vsel %vm305, %v279, 0
        %v325 = vsel %vm305, %v280, 0
        %v328 = vsel %vm305, %v281, 0
        %v331 = vsel %vm305, %v282, 0
        %v334 = vsel %vm305, %v283, 0
        %v337 = vsel %vm305, %v284, 0
        %v340 = vsel %vm305, %v285, 0
        %v343 = vsel %vm305, %v286, 0
        %v346 = vsel %vm305, %v287, 0
        %v349 = vsel %vm305, %v288, 0
        %v352 = vsel %vm305, %v289, 0
        %vm354 = vcmask 1041408
        %v356 = vsel %vm354, %v302, 0
        %358 = vmatprep.subr.bf16.mxu0 0
        %359 = vmatpush1.bf16.msra.mxu0 0
        %360 = vmatprep.subr.bf16.mxu0 0
        %361 = vmatpush1.bf16.msra.mxu0 0
        %362 = vmatprep.subr.bf16.mxu0 0
        %363 = vmatpush1.bf16.msra.mxu0 0
        %364 = vmatprep.subr.bf16.mxu0 0
        %365 = vmatpush1.bf16.msra.mxu0 0
        %366 = vmatprep.subr.bf16.mxu0 0
        %367 = vmatpush1.bf16.msra.mxu0 0
        %368 = vmatprep.subr.bf16.mxu0 0
        %369 = vmatpush1.bf16.msra.mxu0 %v356
        %370 = vmatprep.subr.bf16.mxu0 0
        %371 = vmatpush1.bf16.msra.mxu0 %v301
        %372 = vmatprep.subr.bf16.mxu0 0
        %373 = vmatpush1.bf16.msra.mxu0 %v300
        %374 = vmatprep.subr.bf16.mxu0 0
        %375 = vmatpush2.bf16.msra.mxu0 0
        %376 = vmatprep.subr.bf16.mxu0 0
        %377 = vmatpush2.bf16.msra.mxu0 0
        %378 = vmatprep.subr.bf16.mxu0 0
        %379 = vmatpush2.bf16.msra.mxu0 0
        %380 = vmatprep.subr.bf16.mxu0 0
        %381 = vmatpush2.bf16.msra.mxu0 0
        %382 = vmatprep.subr.bf16.mxu0 0
        %383 = vmatpush2.bf16.msra.mxu0 0
        %384 = vmatprep.subr.bf16.mxu0 0
        %385 = vmatpush2.bf16.msra.mxu0 0
        %386 = vmatprep.subr.bf16.mxu0 0
        %387 = vmatpush2.bf16.msra.mxu0 0
        %388 = vmatprep.subr.bf16.mxu0 0
        %389 = vmatpush2.bf16.msra.mxu0 0
        %390 = vmatprep.mubr.bf16.mxu0 0
        %391 = vmatmul.mubr.bf16.gmra.mxu0 %v307
        %v392 = vpop.f32.mrf.mxu0
        %v393 = vadd.f32 0.0, %v392
        %v394 = vpop.f32.mrf.mxu0
        %v395 = vpop.f32.mrf.mxu0
        %v396 = vadd.f32 0.0, %v395
        %v397 = vpop.f32.mrf.mxu0
        %398 = vmatprep.mubr.bf16.mxu0 0
        %399 = vmatmul.mubr.bf16.gmra.mxu0 %v310
        %v400 = vpop.f32.mrf.mxu0
        %v401 = vadd.f32 0.0, %v400
        %v402 = vpop.f32.mrf.mxu0
        %v403 = vpop.f32.mrf.mxu0
        %v404 = vadd.f32 0.0, %v403
        %v405 = vpop.f32.mrf.mxu0
        %406 = vmatprep.mubr.bf16.mxu0 0
        %407 = vmatmul.mubr.bf16.gmra.mxu0 %v313
        %v408 = vpop.f32.mrf.mxu0
        %v409 = vadd.f32 0.0, %v408
        %v410 = vpop.f32.mrf.mxu0
        %v411 = vpop.f32.mrf.mxu0
        %v412 = vadd.f32 0.0, %v411
        %v413 = vpop.f32.mrf.mxu0
        %414 = vmatprep.mubr.bf16.mxu0 0
        %415 = vmatmul.mubr.bf16.gmra.mxu0 %v316
        %v416 = vpop.f32.mrf.mxu0
        %v417 = vadd.f32 0.0, %v416
        %v418 = vpop.f32.mrf.mxu0
        %v419 = vpop.f32.mrf.mxu0
        %v420 = vadd.f32 0.0, %v419
        %v421 = vpop.f32.mrf.mxu0
        %422 = vmatprep.mubr.bf16.mxu0 0
        %423 = vmatmul.mubr.bf16.gmra.mxu0 %v319
        %v424 = vpop.f32.mrf.mxu0
        %v425 = vadd.f32 0.0, %v424
        %v426 = vpop.f32.mrf.mxu0
        %v427 = vpop.f32.mrf.mxu0
        %v428 = vadd.f32 0.0, %v427
        %v429 = vpop.f32.mrf.mxu0
        %430 = vmatprep.mubr.bf16.mxu0 0
        %431 = vmatmul.mubr.bf16.gmra.mxu0 %v322
        %v432 = vpop.f32.mrf.mxu0
        %v433 = vadd.f32 0.0, %v432
        %v434 = vpop.f32.mrf.mxu0
        %v435 = vpop.f32.mrf.mxu0
        %v436 = vadd.f32 0.0, %v435
        %v437 = vpop.f32.mrf.mxu0
        %438 = vmatprep.mubr.bf16.mxu0 0
        %439 = vmatmul.mubr.bf16.gmra.mxu0 %v325
        %v440 = vpop.f32.mrf.mxu0
        %v441 = vadd.f32 0.0, %v440
        %v442 = vpop.f32.mrf.mxu0
        %v443 = vpop.f32.mrf.mxu0
        %v444 = vadd.f32 0.0, %v443
        %v445 = vpop.f32.mrf.mxu0
        %446 = vmatprep.mubr.bf16.mxu0 0
        %447 = vmatmul.mubr.bf16.gmra.mxu0 %v328
        %v448 = vpop.f32.mrf.mxu0
        %v449 = vadd.f32 0.0, %v448
        %v450 = vpop.f32.mrf.mxu0
        %v451 = vpop.f32.mrf.mxu0
        %v452 = vadd.f32 0.0, %v451
        %v453 = vpop.f32.mrf.mxu0
        %454 = vmatprep.mubr.bf16.mxu0 0
        %455 = vmatmul.mubr.bf16.gmra.mxu0 %v331
        %v456 = vpop.f32.mrf.mxu0
        %v457 = vadd.f32 0.0, %v456
        %v458 = vpop.f32.mrf.mxu0
        %v459 = vpop.f32.mrf.mxu0
        %v460 = vadd.f32 0.0, %v459
        %v461 = vpop.f32.mrf.mxu0
        %462 = vmatprep.mubr.bf16.mxu0 0
        %463 = vmatmul.mubr.bf16.gmra.mxu0 %v334
        %v464 = vpop.f32.mrf.mxu0
        %v465 = vadd.f32 0.0, %v464
        %v466 = vpop.f32.mrf.mxu0
        %v467 = vpop.f32.mrf.mxu0
        %v468 = vadd.f32 0.0, %v467
        %v469 = vpop.f32.mrf.mxu0
        %470 = vmatprep.mubr.bf16.mxu0 0
        %471 = vmatmul.mubr.bf16.gmra.mxu0 %v337
        %v472 = vpop.f32.mrf.mxu0
        %v473 = vadd.f32 0.0, %v472
        %v474 = vpop.f32.mrf.mxu0
        %v475 = vpop.f32.mrf.mxu0
        %v476 = vadd.f32 0.0, %v475
        %v477 = vpop.f32.mrf.mxu0
        %478 = vmatprep.mubr.bf16.mxu0 0
        %479 = vmatmul.mubr.bf16.gmra.mxu0 %v340
        %v480 = vpop.f32.mrf.mxu0
        %v481 = vadd.f32 0.0, %v480
        %v482 = vpop.f32.mrf.mxu0
        %v483 = vpop.f32.mrf.mxu0
        %v484 = vadd.f32 0.0, %v483
        %v485 = vpop.f32.mrf.mxu0
        %486 = vmatprep.mubr.bf16.mxu0 0
        %487 = vmatmul.mubr.bf16.gmra.mxu0 %v343
        %v488 = vpop.f32.mrf.mxu0
        %v489 = vadd.f32 0.0, %v488
        %v490 = vpop.f32.mrf.mxu0
        %v491 = vpop.f32.mrf.mxu0
        %v492 = vadd.f32 0.0, %v491
        %v493 = vpop.f32.mrf.mxu0
        %494 = vmatprep.mubr.bf16.mxu0 0
        %495 = vmatmul.mubr.bf16.gmra.mxu0 %v346
        %v496 = vpop.f32.mrf.mxu0
        %v497 = vadd.f32 0.0, %v496
        %v498 = vpop.f32.mrf.mxu0
        %v499 = vpop.f32.mrf.mxu0
        %v500 = vadd.f32 0.0, %v499
        %v501 = vpop.f32.mrf.mxu0
        %502 = vmatprep.mubr.bf16.mxu0 0
        %503 = vmatmul.mubr.bf16.gmra.mxu0 %v349
        %v504 = vpop.f32.mrf.mxu0
        %v505 = vadd.f32 0.0, %v504
        %v506 = vpop.f32.mrf.mxu0
        %v507 = vpop.f32.mrf.mxu0
        %v508 = vadd.f32 0.0, %v507
        %v509 = vpop.f32.mrf.mxu0
        %510 = vmatprep.mubr.bf16.mxu0 0
        %511 = vmatmul.mubr.bf16.gmra.mxu0 %v352
        %v512 = vpop.f32.mrf.mxu0
        %v513 = vadd.f32 0.0, %v512
        %v514 = vpop.f32.mrf.mxu0
        %v515 = vpop.f32.mrf.mxu0
        %v516 = vadd.f32 0.0, %v515
        %v517 = vpop.f32.mrf.mxu0
        %518 = vdwg.mxu0
        %v519 = vld [vmem:[%s2] sm:$0x1]
        %v520 = vld [vmem:[%s2 + $0x1] sm:$0x1]
        %v521 = vlaneseq
        %v522 = vshrl.u32 %v521, 7
        %v523 = vsub.s32 0, %v522
        %v524 = vrot.slane %v519, %v523
        %v525 = vmul.f32 %v393, %v524
        %v526 = vmul.f32 %v396, %v524
        %v527 = vmul.f32 %v401, %v524
        %v528 = vmul.f32 %v404, %v524
        %v529 = vmul.f32 %v409, %v524
        %v530 = vmul.f32 %v412, %v524
        %v531 = vmul.f32 %v417, %v524
        %v532 = vmul.f32 %v420, %v524
        %v533 = vmul.f32 %v425, %v524
        %v534 = vmul.f32 %v428, %v524
        %v535 = vmul.f32 %v433, %v524
        %v536 = vmul.f32 %v436, %v524
        %v537 = vmul.f32 %v441, %v524
        %v538 = vmul.f32 %v444, %v524
        %v539 = vmul.f32 %v449, %v524
        %v540 = vmul.f32 %v452, %v524
        %v541 = vmul.f32 %v457, %v524
        %v542 = vmul.f32 %v460, %v524
        %v543 = vmul.f32 %v465, %v524
        %v544 = vmul.f32 %v468, %v524
        %v545 = vmul.f32 %v473, %v524
        %v546 = vmul.f32 %v476, %v524
        %v547 = vmul.f32 %v481, %v524
        %v548 = vmul.f32 %v484, %v524
        %v549 = vmul.f32 %v489, %v524
        %v550 = vmul.f32 %v492, %v524
        %v551 = vmul.f32 %v497, %v524
        %v552 = vmul.f32 %v500, %v524
        %v553 = vmul.f32 %v505, %v524
        %v554 = vmul.f32 %v508, %v524
        %v555 = vmul.f32 %v513, %v524
        %v556 = vmul.f32 %v516, %v524
        %v557 = vlaneseq
        %v558 = vshrl.u32 %v557, 7
        %v559 = vsub.s32 0, %v558
        %v560 = vrot.slane %v520, %v559
        %v561 = vadd.f32 %v525, %v560
        %v562 = vadd.f32 %v526, %v560
        %v563 = vadd.f32 %v527, %v560
        %v564 = vadd.f32 %v528, %v560
        %v565 = vadd.f32 %v529, %v560
        %v566 = vadd.f32 %v530, %v560
        %v567 = vadd.f32 %v531, %v560
        %v568 = vadd.f32 %v532, %v560
        %v569 = vadd.f32 %v533, %v560
        %v570 = vadd.f32 %v534, %v560
        %v571 = vadd.f32 %v535, %v560
        %v572 = vadd.f32 %v536, %v560
        %v573 = vadd.f32 %v537, %v560
        %v574 = vadd.f32 %v538, %v560
        %v575 = vadd.f32 %v539, %v560
        %v576 = vadd.f32 %v540, %v560
        %v577 = vadd.f32 %v541, %v560
        %v578 = vadd.f32 %v542, %v560
        %v579 = vadd.f32 %v543, %v560
        %v580 = vadd.f32 %v544, %v560
        %v581 = vadd.f32 %v545, %v560
        %v582 = vadd.f32 %v546, %v560
        %v583 = vadd.f32 %v547, %v560
        %v584 = vadd.f32 %v548, %v560
        %v585 = vadd.f32 %v549, %v560
        %v586 = vadd.f32 %v550, %v560
        %v587 = vadd.f32 %v551, %v560
        %v588 = vadd.f32 %v552, %v560
        %v589 = vadd.f32 %v553, %v560
        %v590 = vadd.f32 %v554, %v560
        %v591 = vadd.f32 %v555, %v560
        %v592 = vadd.f32 %v556, %v560
        %v593 = vmax.f32 %v561, 0.0
        %v594 = vmax.f32 %v562, 0.0
        %v595 = vmax.f32 %v563, 0.0
        %v596 = vmax.f32 %v564, 0.0
        %v597 = vmax.f32 %v565, 0.0
        %v598 = vmax.f32 %v566, 0.0
        %v599 = vmax.f32 %v567, 0.0
        %v600 = vmax.f32 %v568, 0.0
        %v601 = vmax.f32 %v569, 0.0
        %v602 = vmax.f32 %v570, 0.0
        %v603 = vmax.f32 %v571, 0.0
        %v604 = vmax.f32 %v572, 0.0
        %v605 = vmax.f32 %v573, 0.0
        %v606 = vmax.f32 %v574, 0.0
        %v607 = vmax.f32 %v575, 0.0
        %v608 = vmax.f32 %v576, 0.0
        %v609 = vmax.f32 %v577, 0.0
        %v610 = vmax.f32 %v578, 0.0
        %v611 = vmax.f32 %v579, 0.0
        %v612 = vmax.f32 %v580, 0.0
        %v613 = vmax.f32 %v581, 0.0
        %v614 = vmax.f32 %v582, 0.0
        %v615 = vmax.f32 %v583, 0.0
        %v616 = vmax.f32 %v584, 0.0
        %v617 = vmax.f32 %v585, 0.0
        %v618 = vmax.f32 %v586, 0.0
        %v619 = vmax.f32 %v587, 0.0
        %v620 = vmax.f32 %v588, 0.0
        %v621 = vmax.f32 %v589, 0.0
        %v622 = vmax.f32 %v590, 0.0
        %v623 = vmax.f32 %v591, 0.0
        %v624 = vmax.f32 %v592, 0.0
        %625 = vst [vmem:[%s164] sm:$0xff] %v593
        %626 = vst [vmem:[%s164 + $0x8] sm:$0xff] %v594
        %627 = vst [vmem:[%s164 + $0x10] sm:$0xff] %v595
        %628 = vst [vmem:[%s164 + $0x18] sm:$0xff] %v596
        %629 = vst [vmem:[%s164 + $0x20] sm:$0xff] %v597
        %630 = vst [vmem:[%s164 + $0x28] sm:$0xff] %v598
        %631 = vst [vmem:[%s164 + $0x30] sm:$0xff] %v599
        %632 = vst [vmem:[%s164 + $0x38] sm:$0xff] %v600
        %633 = vst [vmem:[%s164 + $0x40] sm:$0xff] %v601
        %634 = vst [vmem:[%s164 + $0x48] sm:$0xff] %v602
        %635 = vst [vmem:[%s164 + $0x50] sm:$0xff] %v603
        %636 = vst [vmem:[%s164 + $0x58] sm:$0xff] %v604
        %637 = vst [vmem:[%s164 + $0x60] sm:$0xff] %v605
        %638 = vst [vmem:[%s164 + $0x68] sm:$0xff] %v606
        %639 = vst [vmem:[%s164 + $0x70] sm:$0xff] %v607
        %640 = vst [vmem:[%s164 + $0x78] sm:$0xff] %v608
        %641 = vst [vmem:[%s164 + $0x80] sm:$0xff] %v609
        %642 = vst [vmem:[%s164 + $0x88] sm:$0xff] %v610
        %643 = vst [vmem:[%s164 + $0x90] sm:$0xff] %v611
        %644 = vst [vmem:[%s164 + $0x98] sm:$0xff] %v612
        %645 = vst [vmem:[%s164 + $0xa0] sm:$0xff] %v613
        %646 = vst [vmem:[%s164 + $0xa8] sm:$0xff] %v614
        %647 = vst [vmem:[%s164 + $0xb0] sm:$0xff] %v615
        %648 = vst [vmem:[%s164 + $0xb8] sm:$0xff] %v616
        %649 = vst [vmem:[%s164 + $0xc0] sm:$0xff] %v617
        %650 = vst [vmem:[%s164 + $0xc8] sm:$0xff] %v618
        %651 = vst [vmem:[%s164 + $0xd0] sm:$0xff] %v619
        %652 = vst [vmem:[%s164 + $0xd8] sm:$0xff] %v620
        %653 = vst [vmem:[%s164 + $0xe0] sm:$0xff] %v621
        %654 = vst [vmem:[%s164 + $0xe8] sm:$0xff] %v622
        %655 = vst [vmem:[%s164 + $0xf0] sm:$0xff] %v623
        %656 = vst [vmem:[%s164 + $0xf8] sm:$0xff] %v624
        %s657 = sand.u32 %s93, 1
        %s658 = scalar_lea.sflag [#allocation3], %s657
        %s659 = sand.u32 %s93, 1
        %s660 = smul.addr %s659, 256
        %s661 = scalar_lea.vmem [#allocation2], %s660
        // Predicated region
        $region33: #{tpu_custom_call.1} parent=31 // pred_check
          %p662 = pneg %p103
        $region34: #{tpu_custom_call.1} parent=31 // pred_check_branch
          %664 = sbr.rel (%p662) target = $region36
        $region35: #{tpu_custom_call.1} parent=31 // pred_region
          %s665 = smul.u32 32, %s17
          %s667 = ssub.s32 4096, 4096
          %668 = vsyncadd %s658, %s667
          %s669 = smul.addr %s665, 128
          %s670 = scalar_lea.hbm %s3, %s669
          %s671 = sshll.u32 %s661, 4
          %s672 = int_to_ptr.vmem [resolvable:$true] %s671
          %677 = dma.vmem_to_hbm [thread:$0]  %s672, 4096, %s670, %s658, 128, 128, 8
        $region36: #{tpu_custom_call.1} parent=31 // pred_fallthru
          _
      $region32: #{tpu_custom_call.1} parent=5 // pred_fallthru
        _
      %p678 = scmp.le.s32.totalorder 2, %s12
      // Predicated region
      $region37: #{tpu_custom_call.1} parent=5 // pred_check
        %p679 = pneg %p678
      $region38: #{tpu_custom_call.1} parent=5 // pred_check_branch
        %681 = sbr.rel (%p679) target = $region40
      $region39: #{tpu_custom_call.1} parent=5 // pred_region
        %s682 = ssub.s32 %s12, 2
        // Predicated region
        $region41: #{tpu_custom_call.1} parent=39 // pred_check
          %p683 = pneg %p109
        $region42: #{tpu_custom_call.1} parent=39 // pred_check_branch
          %685 = sbr.rel (%p683) target = $region44
        $region43: #{tpu_custom_call.1} parent=39 // pred_region
          %s686 = sand.u32 %s94, 1
          %s687 = scalar_lea.sflag [#allocation3], %s686
          %s688 = sand.u32 %s94, 1
          %s689 = smul.addr %s688, 256
          %s690 = scalar_lea.vmem [#allocation2], %s689
          %691 = dma.done %s687, 4096
        $region44: #{tpu_custom_call.1} parent=39 // pred_fallthru
          _
      $region40: #{tpu_custom_call.1} parent=5 // pred_fallthru
        _
    $region6: #{tpu_custom_call.1} parent=1 // loop_footer
      %s16 = sadd.s32 1, %s12
    $region7: #{tpu_custom_call.1} parent=1 // loop_footer_branch
      %11 = sbr.rel target = $region3
    $region8: #{tpu_custom_call.1} parent=1 // loop_exit
      _
    %692 = vsyncpa [#allocation3], 1
    %s693 = scalar_lea.sflag [#allocation3], 1
    %694 = vsyncpa %s693, 1

</llo_original>
